<compile_context>
chip_gen: v6e
topology: v6e:2x2x1
jax: 0.10.0
libtpu: 0.0.40
codegen_flags: <defaults>
</compile_context>

<pallas_src>
import functools

import jax
import jax.numpy as jnp
from jax.experimental import pallas as pl
from jax.experimental.pallas import tpu as pltpu


def _round_up(x, m):
    return ((x + m - 1) // m) * m


def _linear_kernel(x_ref, w_ref, b_ref, o_ref):
    # x_ref: (bm, Kp)   block of flattened input rows
    # w_ref: (Kp, bn)   resident weight tile (constant over the M grid axis)
    # b_ref: (1,  bn)   resident bias tile
    # o_ref: (bm, bn)   output tile
    acc = jnp.dot(x_ref[...], w_ref[...], preferred_element_type=jnp.float32)
    o_ref[...] = (acc + b_ref[...]).astype(o_ref.dtype)


def _linear_pallas(x2, w_t, bias, *, block_m):
    """x2: (Mp, Kp), w_t: (Kp, Np), bias: (1, Np) -> (Mp, Np)."""
    Mp, Kp = x2.shape
    Np = w_t.shape[1]
    bn = 128  # lane-dense output tile width
    grid = (Mp // block_m, Np // bn)
    return pl.pallas_call(
        _linear_kernel,
        out_shape=jax.ShapeDtypeStruct((Mp, Np), jnp.float32),
        grid_spec=pltpu.PrefetchScalarGridSpec(
            num_scalar_prefetch=0,
            grid=grid,
            in_specs=[
                pl.BlockSpec((block_m, Kp), lambda i, j: (i, 0)),
                pl.BlockSpec((Kp, bn), lambda i, j: (0, j)),
                pl.BlockSpec((1, bn), lambda i, j: (0, j)),
            ],
            out_specs=pl.BlockSpec((block_m, bn), lambda i, j: (i, j)),
        ),
        compiler_params=pltpu.CompilerParams(
            dimension_semantics=("parallel", "parallel"),
        ),
    )(x2, w_t, bias)


@jax.jit
def simple_linear_forward(x, weight, bias):
    """SimpleLinear.forward.  x: (T, B, nIn), weight: (nOut, nIn), bias: (nOut,)
    -> (T, B, nOut)."""
    T, B, n_in = x.shape
    n_out = weight.shape[0]
    M = T * B

    # Flatten exactly like x.view(batch_size * timesteps, -1) on a (T, B, nIn)
    # row-major tensor.
    x2 = x.reshape(M, n_in)

    # Pad contraction dim and output dim to lane multiples; pad M to the tile.
    Kp = _round_up(n_in, 128)
    Np = _round_up(n_out, 128)
    bm = 256 if M >= 256 else _round_up(M, 8)
    Mp = _round_up(M, bm)

    x_p = jnp.zeros((Mp, Kp), jnp.float32).at[:M, :n_in].set(x2)
    w_p = jnp.zeros((Kp, Np), jnp.float32).at[:n_in, :n_out].set(weight.T)
    b_p = jnp.zeros((1, Np), jnp.float32).at[0, :n_out].set(bias)

    out = _linear_pallas(x_p, w_p, b_p, block_m=bm)   # (Mp, Np)
    return out[:M, :n_out].reshape(T, B, n_out)


def init_params(key, n_in, n_out):
    """Deterministic nn.Linear-shaped params: weight (nOut, nIn), bias (nOut,)."""
    kw, kb = jax.random.split(key)
    bound = 1.0 / jnp.sqrt(jnp.float32(n_in))
    w = jax.random.uniform(kw, (n_out, n_in), jnp.float32, -bound, bound)
    b = jax.random.uniform(kb, (n_out,), jnp.float32, -bound, bound)
    return w, b


def _reference_forward(x, weight, bias):
    T, B, n_in = x.shape
    y = x.reshape(T * B, n_in) @ weight.T + bias[None, :]
    return y.reshape(T, B, weight.shape[0])


if __name__ == "__main__":
    T, B, n_in, n_out = 8, 2, 32, 64

    key = jax.random.PRNGKey(0)
    kx, kp = jax.random.split(key)
    x = jax.random.normal(kx, (T, B, n_in), jnp.float32)
    weight, bias = init_params(kp, n_in, n_out)

    y = simple_linear_forward(x, weight, bias)
    y = jax.block_until_ready(y)

    y_ref = _reference_forward(x, weight, bias)
    assert y.shape == (T, B, n_out), y.shape
    assert jnp.allclose(y, y_ref, atol=1e-5, rtol=1e-5), "mismatch vs reference"

    print("KERNEL_OK")
</pallas_src>

<mosaic_0001>
module attributes {stable_mosaic.version = 11 : i64} {
  func.func @_linear_kernel(%arg0: i32, %arg1: i32, %arg2: memref<16x128xf32, #tpu.memory_space<vmem>>, %arg3: memref<128x128xf32, #tpu.memory_space<vmem>>, %arg4: memref<1x128xf32, #tpu.memory_space<vmem>>, %arg5: memref<16x128xf32, #tpu.memory_space<vmem>>) attributes {dimension_semantics = [#tpu.dimension_semantics<parallel>, #tpu.dimension_semantics<parallel>], iteration_bounds = array<i64: 1, 1>, scalar_prefetch = 0 : i64, scratch_operands = 0 : i64, tpu.core_type = #tpu.core_type<tc>, window_params = [{transform_indices = @transform_0, window_bounds = array<i64: 16, 128>}, {transform_indices = @transform_1, window_bounds = array<i64: 128, 128>}, {transform_indices = @transform_2, window_bounds = array<i64: 1, 128>}, {transform_indices = @transform_3, window_bounds = array<i64: 16, 128>}]} {
    %c0 = arith.constant 0 : index
    %c0_0 = arith.constant 0 : index
    %0 = vector.load %arg2[%c0, %c0_0] : memref<16x128xf32, #tpu.memory_space<vmem>>, vector<16x128xf32>
    %c0_1 = arith.constant 0 : index
    %c0_2 = arith.constant 0 : index
    %1 = vector.load %arg3[%c0_1, %c0_2] : memref<128x128xf32, #tpu.memory_space<vmem>>, vector<128x128xf32>
    %cst = arith.constant dense<0.000000e+00> : vector<16x128xf32>
    %2 = tpu.matmul %0, %1, %cst {dimension_numbers = #tpu.dot_dimension_numbers<[1], [0], [0], [1], [0, 0, 1, 1], [], []>} : vector<16x128xf32>, vector<128x128xf32>, vector<16x128xf32> -> vector<16x128xf32>
    %c0_3 = arith.constant 0 : index
    %c0_4 = arith.constant 0 : index
    %3 = vector.load %arg4[%c0_3, %c0_4] : memref<1x128xf32, #tpu.memory_space<vmem>>, vector<1x128xf32>
    %4 = vector.broadcast %3 : vector<1x128xf32> to vector<16x128xf32>
    %5 = arith.addf %2, %4 : vector<16x128xf32>
    %c0_5 = arith.constant 0 : index
    %c0_6 = arith.constant 0 : index
    %6 = vector.load %arg5[%c0_5, %c0_6] : memref<16x128xf32, #tpu.memory_space<vmem>>, vector<16x128xf32>
    tpu.vector_store %arg5[%c0_5, %c0_6], %5 {strides = array<i32>} : memref<16x128xf32, #tpu.memory_space<vmem>>, vector<16x128xf32>,
    return
  }
  func.func @transform_0(%arg0: i32, %arg1: i32) -> (i32, i32) {
    %c0_i32 = arith.constant 0 : i32
    %c0_i32_0 = arith.constant 0 : i32
    return %arg0, %c0_i32 : i32, i32
  }
  func.func @transform_1(%arg0: i32, %arg1: i32) -> (i32, i32) {
    %c0_i32 = arith.constant 0 : i32
    %c0_i32_0 = arith.constant 0 : i32
    return %c0_i32, %arg1 : i32, i32
  }
  func.func @transform_2(%arg0: i32, %arg1: i32) -> (i32, i32) {
    %c0_i32 = arith.constant 0 : i32
    %c0_i32_0 = arith.constant 0 : i32
    return %c0_i32, %arg1 : i32, i32
  }
  func.func @transform_3(%arg0: i32, %arg1: i32) -> (i32, i32) {
    %c0_i32 = arith.constant 0 : i32
    return %arg0, %arg1 : i32, i32
  }
}

</mosaic_0001>

<llo_original>
// kernel: simple_linear_forward.1
$region0: #{simple_linear_forward.1}
  #allocation0 [shape = 'u32[]', space=smem, size = 0x4, offset = 0x4, fixed_abs, tag = 'smem constant byte address 0x4 - core index']
  #allocation1 [shape = 'u32[144,128]{1,0:T(1,128)}', space=vmem, size = 0x12000, scoped, tag = 'internal scratch']
  %s0 = inlined_call_operand.vmem [shape: f32[16,128], index: 0, kind: input, shape index: {}]
  %s1 = inlined_call_operand.vmem [shape: f32[128,128], index: 1, kind: input, shape index: {}]
  %s2 = inlined_call_operand.vmem [shape: f32[1,128], index: 2, kind: input, shape index: {}]
  %s3 = inlined_call_operand.hbm [shape: f32[16,128], index: 3, kind: output, shape index: {}]
  %s4 = sld [smem:[#allocation0]]
  $region22: #{simple_linear_forward.1} parent=0
    _
  %s6 = ssub.s32 1, %s4
  %s7 = scalar_select 0, %s6, %s4
  $region1: #{simple_linear_forward.1} parent=0
    #allocation2 [shape = 'u8[8192]{0}', space=vmem, size = 0x2000, scoped, tag = 'output window, operand 0, single buffered']
    #allocation3 [shape = 's32[1]{0}', space=sflag, size = 0x4, scoped, tag = 'scoped memory for simple_linear_forward.1']
    %8 = vsyncpa [#allocation3], 0
    // Predicated region
    $region2: #{simple_linear_forward.1} parent=1 // pred_check
      _
    $region3: #{simple_linear_forward.1} parent=1 // pred_check_branch
      %10 = sbr.rel (0) target = $region5
    $region4: #{simple_linear_forward.1} parent=1 // pred_region
      _
    $region5: #{simple_linear_forward.1} parent=1 // pred_fallthru
      _
    // Predicated region
    $region6: #{simple_linear_forward.1} parent=1 // pred_check
      _
    $region7: #{simple_linear_forward.1} parent=1 // pred_check_branch
      %12 = sbr.rel (0) target = $region9
    $region8: #{simple_linear_forward.1} parent=1 // pred_region
      _
    $region9: #{simple_linear_forward.1} parent=1 // pred_fallthru
      _
    // Predicated region
    $region10: #{simple_linear_forward.1} parent=1 // pred_check
      _
    $region11: #{simple_linear_forward.1} parent=1 // pred_check_branch
      %14 = sbr.rel (0) target = $region13
    $region12: #{simple_linear_forward.1} parent=1 // pred_region
      _
    $region13: #{simple_linear_forward.1} parent=1 // pred_fallthru
      _
    %v15 = vld [vmem:[%s0] sm:$0xff]
    %v16 = vld [vmem:[%s0 + $0x8] sm:$0xff]
    %v17 = vld [vmem:[%s1] sm:$0xff]
    %v18 = vld [vmem:[%s1 + $0x8] sm:$0xff]
    %v19 = vld [vmem:[%s1 + $0x10] sm:$0xff]
    %v20 = vld [vmem:[%s1 + $0x18] sm:$0xff]
    %v21 = vld [vmem:[%s1 + $0x20] sm:$0xff]
    %v22 = vld [vmem:[%s1 + $0x28] sm:$0xff]
    %v23 = vld [vmem:[%s1 + $0x30] sm:$0xff]
    %v24 = vld [vmem:[%s1 + $0x38] sm:$0xff]
    %v25 = vld [vmem:[%s1 + $0x40] sm:$0xff]
    %v26 = vld [vmem:[%s1 + $0x48] sm:$0xff]
    %v27 = vld [vmem:[%s1 + $0x50] sm:$0xff]
    %v28 = vld [vmem:[%s1 + $0x58] sm:$0xff]
    %v29 = vld [vmem:[%s1 + $0x60] sm:$0xff]
    %v30 = vld [vmem:[%s1 + $0x68] sm:$0xff]
    %v31 = vld [vmem:[%s1 + $0x70] sm:$0xff]
    %v32 = vld [vmem:[%s1 + $0x78] sm:$0xff]
    %v33 = vld [vmem:[%s2] sm:$0x1]
    %v35 = vlaneseq
    %v36 = vshrl.u32 %v35, 7
    %v37 = vsub.s32 0, %v36
    %v38 = vrot.slane %v33, %v37
    %40 = vmatprep.subr.mxu0 0.0
    %41 = vmatpush1.msra.mxu0 %v32
    %42 = vmatprep.subr.mxu0 0.0
    %43 = vmatpush1.msra.mxu0 %v31
    %44 = vmatprep.subr.mxu0 0.0
    %45 = vmatpush1.msra.mxu0 %v30
    %46 = vmatprep.subr.mxu0 0.0
    %47 = vmatpush1.msra.mxu0 %v29
    %48 = vmatprep.subr.mxu0 0.0
    %49 = vmatpush1.msra.mxu0 %v28
    %50 = vmatprep.subr.mxu0 0.0
    %51 = vmatpush1.msra.mxu0 %v27
    %52 = vmatprep.subr.mxu0 0.0
    %53 = vmatpush1.msra.mxu0 %v26
    %54 = vmatprep.subr.mxu0 0.0
    %55 = vmatpush1.msra.mxu0 %v25
    %56 = vmatprep.subr.mxu0 0.0
    %57 = vmatpush1.msra.mxu0 %v24
    %58 = vmatprep.subr.mxu0 0.0
    %59 = vmatpush1.msra.mxu0 %v23
    %60 = vmatprep.subr.mxu0 0.0
    %61 = vmatpush1.msra.mxu0 %v22
    %62 = vmatprep.subr.mxu0 0.0
    %63 = vmatpush1.msra.mxu0 %v21
    %64 = vmatprep.subr.mxu0 0.0
    %65 = vmatpush1.msra.mxu0 %v20
    %66 = vmatprep.subr.mxu0 0.0
    %67 = vmatpush1.msra.mxu0 %v19
    %68 = vmatprep.subr.mxu0 0.0
    %69 = vmatpush1.msra.mxu0 %v18
    %70 = vmatprep.subr.mxu0 0.0
    %71 = vmatpush1.msra.mxu0 %v17
    %72 = vmatprep.subr.mxu0 0.0
    %73 = vmatpush2.msra.mxu0 0.0
    %74 = vmatprep.subr.mxu0 0.0
    %75 = vmatpush2.msra.mxu0 0.0
    %76 = vmatprep.subr.mxu0 0.0
    %77 = vmatpush2.msra.mxu0 0.0
    %78 = vmatprep.subr.mxu0 0.0
    %79 = vmatpush2.msra.mxu0 0.0
    %80 = vmatprep.subr.mxu0 0.0
    %81 = vmatpush2.msra.mxu0 0.0
    %82 = vmatprep.subr.mxu0 0.0
    %83 = vmatpush2.msra.mxu0 0.0
    %84 = vmatprep.subr.mxu0 0.0
    %85 = vmatpush2.msra.mxu0 0.0
    %86 = vmatprep.subr.mxu0 0.0
    %87 = vmatpush2.msra.mxu0 0.0
    %88 = vmatprep.subr.mxu0 0.0
    %89 = vmatpush2.msra.mxu0 0.0
    %90 = vmatprep.subr.mxu0 0.0
    %91 = vmatpush2.msra.mxu0 0.0
    %92 = vmatprep.subr.mxu0 0.0
    %93 = vmatpush2.msra.mxu0 0.0
    %94 = vmatprep.subr.mxu0 0.0
    %95 = vmatpush2.msra.mxu0 0.0
    %96 = vmatprep.subr.mxu0 0.0
    %97 = vmatpush2.msra.mxu0 0.0
    %98 = vmatprep.subr.mxu0 0.0
    %99 = vmatpush2.msra.mxu0 0.0
    %100 = vmatprep.subr.mxu0 0.0
    %101 = vmatpush2.msra.mxu0 0.0
    %102 = vmatprep.subr.mxu0 0.0
    %103 = vmatpush2.msra.mxu0 0.0
    %104 = vmatprep.mubr.f32.mxu0 0.0
    %105 = vmatmul.mubr.f32.gmra.mxu0 %v15
    %v106 = vpop.f32.mrf.mxu0
    %v107 = vadd.f32 %v38, %v106
    %v108 = vpop.f32.mrf.mxu0
    %109 = vmatprep.mubr.f32.mxu0 0.0
    %110 = vmatmul.mubr.f32.gmra.mxu0 %v16
    %v111 = vpop.f32.mrf.mxu0
    %v112 = vadd.f32 %v38, %v111
    %v113 = vpop.f32.mrf.mxu0
    %114 = vdwg.mxu0
    %115 = vst [vmem:[#allocation2] sm:$0xff] %v107
    %116 = vst [vmem:[#allocation2 + $0x8] sm:$0xff] %v112
    // Predicated region
    $region14: #{simple_linear_forward.1} parent=1 // pred_check
      _
    $region15: #{simple_linear_forward.1} parent=1 // pred_check_branch
      %118 = sbr.rel (0) target = $region17
    $region16: #{simple_linear_forward.1} parent=1 // pred_region
      %s120 = ssub.s32 256, 256
      %121 = vsyncadd [#allocation3], %s120
      %s122 = sshll.u32 [#allocation2], 4
      %s123 = int_to_ptr.vmem [resolvable:$true] %s122
      %128 = dma.vmem_to_hbm [thread:$0]  %s123, 256, %s3, [#allocation3], 128, 128, 8
    $region17: #{simple_linear_forward.1} parent=1 // pred_fallthru
      _
    // Predicated region
    $region18: #{simple_linear_forward.1} parent=1 // pred_check
      _
    $region19: #{simple_linear_forward.1} parent=1 // pred_check_branch
      %130 = sbr.rel (0) target = $region21
    $region20: #{simple_linear_forward.1} parent=1 // pred_region
      %131 = dma.done [#allocation3], 256
    $region21: #{simple_linear_forward.1} parent=1 // pred_fallthru
      _
    %132 = vsyncpa [#allocation3], 1

</llo_original>
